<compile_context>
chip_gen: v5e
topology: v5e:2x2
jax: 0.10.0
libtpu: 0.0.40
codegen_flags: <defaults>
</compile_context>

<pallas_src>
import functools

import jax
import jax.numpy as jnp
from jax.experimental import pallas as pl
from jax.experimental.pallas import tpu as pltpu

_EPS = 1e-12                  # torch.nn.functional.normalize default eps
_E_LAYERS = (0, 1, 2, 3, 4)   # CodaPrompt._init_smart

_VMEM = pl.BlockSpec(memory_space=pltpu.MemorySpace.VMEM)


def _round_up(x, m):
    return ((x + m - 1) // m) * m


def _choose_row_tile(b):
    """(b_pad, tm): batch padded to a multiple of 8; largest row tile <= 256
    that evenly divides it (partial-block free, <= 7 padded rows)."""
    b_pad = _round_up(b, 8)
    tm, t = 8, 8
    while t <= min(b_pad, 256):
        if b_pad % t == 0:
            tm = t
        t += 8
    return b_pad, tm


# ------------------------------------------------------------------ kernels --

def _coda_prompt_kernel(x_ref, w_ref, p_ref, o_ref, *, f_pad, eps):
    """Fused CODA-Prompt weighted-prompt assembly for one (row, col) tile.

    x_ref : (tm, key_d)       query rows (row-tiled over grid axis 0)
    w_ref : (2*f_pad, key_d)  stacked [A*n_K ; A*A] (resident: constant index_map)
    p_ref : (f_pad, tc)       prompt pool, flattened + column-tiled (axis 1)
    o_ref : (tm, tc)          lane-dense output tile of P_ = aq_k @ p_flat
    """
    x = x_ref[...].astype(jnp.float32)
    w = w_ref[...].astype(jnp.float32)
    tm = x.shape[0]

    # ONE MXU call for numerator and squared denominator:
    #   num[b,j]  = sum_d x[b,d]   * (A*n_K)[j,d]
    #   den2[b,j] = sum_d x[b,d]^2 * (A*A)[j,d]   ( = ||x[b,:]*A[j,:]||^2 )
    lhs = jnp.concatenate([x, x * x], axis=0)                   # (2*tm, key_d)
    dn = (((1,), (1,)), ((), ()))                               # lhs @ w^T
    r = jax.lax.dot_general(lhs, w, dn, preferred_element_type=jnp.float32)
    num = r[:tm, :f_pad]
    den2 = r[tm:, f_pad:]

    # aq_k = num / max(den, eps) == num * rsqrt(max(den^2, eps^2))  (EUP rsqrt,
    # VALU multiply; den path kept f32).  Padded pool rows give den2=0 -> 0.
    aq_k = num * jax.lax.rsqrt(jnp.maximum(den2, eps * eps))    # (tm, f_pad)

    # P_ column tile = aq_k @ p_flat[:, col]  (MXU; bf16 operands if p is bf16)
    p = p_ref[...]
    out = jnp.dot(aq_k.astype(p.dtype), p, preferred_element_type=jnp.float32)
    o_ref[...] = out.astype(o_ref.dtype)


def _ortho3_kernel(k_ref, a_ref, p_ref, o_ref):
    """ortho_penalty(K) + ortho_penalty(A) + ortho_penalty(p_flat) -> (1, 1)."""
    def pen(t_ref):
        t = t_ref[...].astype(jnp.float32)                      # (n, m)
        n = t.shape[0]
        g = jax.lax.dot_general(t, t, (((1,), (1,)), ((), ())),
                                preferred_element_type=jnp.float32)   # t @ t.T
        row = jax.lax.broadcasted_iota(jnp.int32, (n, n), 0)
        col = jax.lax.broadcasted_iota(jnp.int32, (n, n), 1)
        d = g - (row == col).astype(jnp.float32)
        tot = jnp.sum(jnp.sum(d * d, axis=1, keepdims=True), axis=0, keepdims=True)
        return tot * (1.0 / float(n * n))

    o_ref[...] = pen(k_ref) + pen(a_ref) + pen(p_ref)


# ----------------------------------------------------------------- wrappers --

def coda_prompt_layer(x_querry, a, k, p, *, eps=_EPS, matmul_dtype=None):
    """Returns (Ek, Ev) for one e-layer; single fused pallas_call."""
    b, key_d = x_querry.shape
    f, plen, emb_d = p.shape
    width = plen * emb_d

    # ---- wrapper-side prep (one fused XLA op over data we must pad anyway) ---
    # Pad the active pool rows to a multiple of 8 (kept minimal so p, the
    # dominant DMA, does not grow); zero rows contribute nothing.
    f_pad = _round_up(max(f, 8), 8)
    pad_f = f_pad - f
    if pad_f:
        a = jnp.pad(a, ((0, pad_f), (0, 0)))
        k = jnp.pad(k, ((0, pad_f), (0, 0)))
        p = jnp.pad(p, ((0, pad_f), (0, 0), (0, 0)))
    # n_K = K / max(||K||, eps) folded as rsqrt; stacked resident weight.
    n_k = k * jax.lax.rsqrt(
        jnp.maximum(jnp.sum(k * k, axis=1, keepdims=True), eps * eps))
    w = jnp.concatenate([a * n_k, a * a], axis=0)               # (2*f_pad, key_d)
    p_flat = p.reshape(f_pad, width)
    if matmul_dtype is not None:
        # Halves the dominant HBM->VMEM transfer; store params in bf16 to avoid
        # the per-call cast in production.
        p_flat = p_flat.astype(matmul_dtype)

    # ---- batch padding / row tile (multiple of 8, capped at 256) -------------
    b_pad, tm = _choose_row_tile(b)
    if b_pad != b:
        x_querry = jnp.pad(x_querry, ((0, b_pad - b), (0, 0)))

    # ---- output column tiling: 2 lane-dense "parallel" tiles when possible so
    # the grid has >= 2 steps (v7x megacore) splitting the wide P_ matmul and
    # its writeback across cores.
    if width % 256 == 0 and width >= 256:
        tc, n_col = width // 2, 2
    else:
        tc, n_col = width, 1

    grid = (b_pad // tm, n_col)
    out = pl.pallas_call(
        functools.partial(_coda_prompt_kernel, f_pad=f_pad, eps=eps),
        out_shape=jax.ShapeDtypeStruct((b_pad, width), x_querry.dtype),
        grid=grid,
        in_specs=[
            pl.BlockSpec((tm, key_d), lambda r, c: (r, 0)),         # queries
            pl.BlockSpec((2 * f_pad, key_d), lambda r, c: (0, 0)),  # [A*nK;A*A] resident
            pl.BlockSpec((f_pad, tc), lambda r, c: (0, c)),         # p: col-tiled
        ],
        out_specs=pl.BlockSpec((tm, tc), lambda r, c: (r, c)),
        compiler_params=pltpu.CompilerParams(
            dimension_semantics=("parallel", "parallel"),
            vmem_limit_bytes=48 * 1024 * 1024),
    )(x_querry, w, p_flat)
    # TODO(synk): pipeline_mode=pl.Buffered(1) on the resident w/p specs would
    # drop their redundant double buffers (v7x VMEM headroom); default kept for
    # portability.

    i = plen // 2
    p_ = out[:b].reshape(b, plen, emb_d)        # zero-cost reshape; row slice only
    return p_[:, :i, :], p_[:, i:, :]


def ortho_penalty_sum(k, a, p_flat):
    """Fused ((K@K.T-I)^2).mean() + ((A@A.T-I)^2).mean() + ((P@P.T-I)^2).mean()."""
    out = pl.pallas_call(
        _ortho3_kernel,
        out_shape=jax.ShapeDtypeStruct((1, 1), jnp.float32),
        in_specs=[_VMEM, _VMEM, _VMEM],
        out_specs=_VMEM,
    )(k, a, p_flat)
    return out[0, 0]


def coda_prompt_forward(params, x_querry, x_block, *, l, e_pool_size, n_tasks,
                        ortho_mu=0.0, task_count=0, train=False, task_id=None,
                        matmul_dtype=None):
    """CodaPrompt.forward(x_querry, l, x_block, train, task_id) -> ([Ek, Ev], loss, x_block)."""
    del task_id  # unused by the reference forward
    if l not in _E_LAYERS:
        return None, jnp.zeros((), jnp.float32), x_block

    pt = e_pool_size // n_tasks
    f = (task_count + 1) * pt
    # train/eval slicing differs only via .detach() (gradient flow); the forward
    # VALUES always come from pool rows [0:f].
    k = params["e_k"][l][:f]
    a = params["e_a"][l][:f]
    p = params["e_p"][l][:f]

    ek, ev = coda_prompt_layer(x_querry, a, k, p, matmul_dtype=matmul_dtype)

    if train and ortho_mu > 0:
        loss = ortho_penalty_sum(k, a, p.reshape(f, -1)) * ortho_mu
    else:
        loss = jnp.zeros((), jnp.float32)
    return [ek, ev], loss, x_block


# --------------------------------------------------------------- parameters --

def init_coda_prompt_params(key, e_pool_size, e_p_length, emb_d, key_d):
    # TODO(synk): gram_schmidt() / process_task_count() are host-side parameter
    # (re)initialisation procedures (data-dependent rejection sampling), not part
    # of the forward pass; plain uniform init (tensor_prompt ortho=False) used.
    params = {"e_p": {}, "e_k": {}, "e_a": {}}
    for layer in _E_LAYERS:
        kp, kk, ka = jax.random.split(jax.random.fold_in(key, layer), 3)
        params["e_p"][layer] = jax.random.uniform(
            kp, (e_pool_size, e_p_length, emb_d), jnp.float32)
        params["e_k"][layer] = jax.random.uniform(
            kk, (e_pool_size, key_d), jnp.float32)
        params["e_a"][layer] = jax.random.uniform(
            ka, (e_pool_size, key_d), jnp.float32)
    return params


# --------------------------------------------------------------- reference ---

def _coda_prompt_reference(x_querry, a, k, p, eps=_EPS):
    """Pure-JAX transcription of the PyTorch forward (numerics check)."""
    a_querry = jnp.einsum('bd,kd->bkd', x_querry, a)
    n_k = k / jnp.maximum(jnp.linalg.norm(k, axis=1, keepdims=True), eps)
    q = a_querry / jnp.maximum(jnp.linalg.norm(a_querry, axis=2, keepdims=True), eps)
    aq_k = jnp.einsum('bkd,kd->bk', q, n_k)
    p_ = jnp.einsum('bk,kld->bld', aq_k, p)
    i = p.shape[1] // 2
    return p_[:, :i, :], p_[:, i:, :]


# -------------------------------------------------------------------- main ---

if __name__ == "__main__":
    # Small shapes consistent with the module (real model: emb_d = key_d = 768,
    # e_pool_size = 100, e_p_length = 8, 5 e-layers).
    EMB_D = 32
    KEY_D = 32
    N_TASKS = 5
    E_POOL = 10          # prompt_param[0]
    E_P_LEN = 8          # prompt_param[1]
    ORTHO_MU = 0.1       # prompt_param[2]
    B = 2
    SEQ = 8
    TASK_COUNT = 2       # -> forward uses pool rows [0 : (2+1)*2] = [0:6]
    LAYER = 0

    key = jax.random.PRNGKey(0)
    params = init_coda_prompt_params(key, E_POOL, E_P_LEN, EMB_D, KEY_D)
    kq, kb = jax.random.split(jax.random.fold_in(key, 1000))
    x_querry = jax.random.normal(kq, (B, KEY_D), jnp.float32)
    x_block = jax.random.normal(kb, (B, SEQ, EMB_D), jnp.float32)

    common = dict(l=LAYER, e_pool_size=E_POOL, n_tasks=N_TASKS,
                  ortho_mu=ORTHO_MU, task_count=TASK_COUNT)

    # ---- eval-mode forward, exact f32 matmuls -------------------------------
    fwd = jax.jit(functools.partial(coda_prompt_forward, train=False, **common))
    (ek, ev), loss, xb = fwd(params, x_querry, x_block)
    ek, ev, loss, xb = jax.block_until_ready((ek, ev, loss, xb))

    assert ek.shape == (B, E_P_LEN // 2, EMB_D), ek.shape
    assert ev.shape == (B, E_P_LEN - E_P_LEN // 2, EMB_D), ev.shape
    assert xb.shape == x_block.shape
    assert bool(jnp.all(jnp.isfinite(ek))) and bool(jnp.all(jnp.isfinite(ev)))
    assert float(loss) == 0.0

    F_USED = (TASK_COUNT + 1) * (E_POOL // N_TASKS)
    a_l = params["e_a"][LAYER][:F_USED]
    k_l = params["e_k"][LAYER][:F_USED]
    p_l = params["e_p"][LAYER][:F_USED]
    ek_ref, ev_ref = _coda_prompt_reference(x_querry, a_l, k_l, p_l)
    assert bool(jnp.allclose(ek, ek_ref, rtol=1e-4, atol=1e-4))
    assert bool(jnp.allclose(ev, ev_ref, rtol=1e-4, atol=1e-4))

    # ---- bf16 path for the wide P_ matmul (f32 accumulate, looser check) -----
    fwd_bf16 = jax.jit(functools.partial(coda_prompt_forward, train=False,
                                         matmul_dtype=jnp.bfloat16, **common))
    (ek16, ev16), _, _ = jax.block_until_ready(fwd_bf16(params, x_querry, x_block))
    assert bool(jnp.allclose(ek16, ek_ref, rtol=3e-2, atol=3e-2))
    assert bool(jnp.allclose(ev16, ev_ref, rtol=3e-2, atol=3e-2))

    # ---- train-mode forward (exercises the fused ortho-penalty kernel) -------
    fwd_tr = jax.jit(functools.partial(coda_prompt_forward, train=True, **common))
    (_, _), loss_tr, _ = fwd_tr(params, x_querry, x_block)
    loss_tr = jax.block_until_ready(loss_tr)

    def _pen(t):
        g = jnp.matmul(t, t.T, precision=jax.lax.Precision.HIGHEST)
        return jnp.mean((g - jnp.eye(t.shape[0], dtype=t.dtype)) ** 2)

    loss_ref = ORTHO_MU * (_pen(k_l) + _pen(a_l) + _pen(p_l.reshape(F_USED, -1)))
    assert bool(jnp.isfinite(loss_tr))
    assert bool(jnp.allclose(loss_tr, loss_ref, rtol=1e-3, atol=1e-3))

    print("KERNEL_OK")
</pallas_src>

<mosaic_0001>
module attributes {stable_mosaic.version = 11 : i64} {
  func.func @_coda_prompt_kernel(%arg0: i32, %arg1: i32, %arg2: memref<8x32xf32, #tpu.memory_space<vmem>>, %arg3: memref<16x32xf32, #tpu.memory_space<vmem>>, %arg4: memref<8x128xf32, #tpu.memory_space<vmem>>, %arg5: memref<8x128xf32, #tpu.memory_space<vmem>>) attributes {dimension_semantics = [#tpu.dimension_semantics<parallel>, #tpu.dimension_semantics<parallel>], iteration_bounds = array<i64: 1, 2>, scalar_prefetch = 0 : i64, scratch_operands = 0 : i64, tpu.core_type = #tpu.core_type<tc>, window_params = [{transform_indices = @transform_0, window_bounds = array<i64: 8, 32>}, {pipeline_mode = #tpu.pipeline_mode<synchronous>, transform_indices = @transform_1, window_bounds = array<i64: 16, 32>}, {transform_indices = @transform_2, window_bounds = array<i64: 8, 128>}, {transform_indices = @transform_3, window_bounds = array<i64: 8, 128>}]} {
    %c0 = arith.constant 0 : index
    %c0_0 = arith.constant 0 : index
    %0 = vector.load %arg2[%c0, %c0_0] : memref<8x32xf32, #tpu.memory_space<vmem>>, vector<8x32xf32>
    %c0_1 = arith.constant 0 : index
    %c0_2 = arith.constant 0 : index
    %1 = vector.load %arg3[%c0_1, %c0_2] : memref<16x32xf32, #tpu.memory_space<vmem>>, vector<16x32xf32>
    %2 = arith.mulf %0, %0 : vector<8x32xf32>
    %3 = tpu.concatenate %0, %2 in 0 : vector<8x32xf32>, vector<8x32xf32> -> vector<16x32xf32>
    %cst = arith.constant dense<0.000000e+00> : vector<16x16xf32>
    %4 = tpu.matmul %3, %1, %cst {dimension_numbers = #tpu.dot_dimension_numbers<[1], [1], [0], [0], [0, 0, 1, 0], [], []>} : vector<16x32xf32>, vector<16x32xf32>, vector<16x16xf32> -> vector<16x16xf32>
    %5 = vector.extract_strided_slice %4 {offsets = [0, 0], sizes = [8, 8], strides = [1, 1]} : vector<16x16xf32> to vector<8x8xf32>
    %6 = vector.extract_strided_slice %4 {offsets = [8, 8], sizes = [8, 8], strides = [1, 1]} : vector<16x16xf32> to vector<8x8xf32>
    %cst_3 = arith.constant 1.000000e-24 : f32
    %7 = vector.broadcast %cst_3 : f32 to vector<8x8xf32>
    %8 = arith.maximumf %6, %7 : vector<8x8xf32>
    %9 = math.rsqrt %8 : vector<8x8xf32>
    %10 = arith.mulf %5, %9 : vector<8x8xf32>
    %c0_4 = arith.constant 0 : index
    %c0_5 = arith.constant 0 : index
    %11 = vector.load %arg4[%c0_4, %c0_5] : memref<8x128xf32, #tpu.memory_space<vmem>>, vector<8x128xf32>
    %cst_6 = arith.constant dense<0.000000e+00> : vector<8x128xf32>
    %12 = tpu.matmul %10, %11, %cst_6 {dimension_numbers = #tpu.dot_dimension_numbers<[1], [0], [0], [1], [0, 0, 1, 1], [], []>} : vector<8x8xf32>, vector<8x128xf32>, vector<8x128xf32> -> vector<8x128xf32>
    %c0_7 = arith.constant 0 : index
    %c0_8 = arith.constant 0 : index
    %13 = vector.load %arg5[%c0_7, %c0_8] : memref<8x128xf32, #tpu.memory_space<vmem>>, vector<8x128xf32>
    tpu.vector_store %arg5[%c0_7, %c0_8], %12 {strides = array<i32>} : memref<8x128xf32, #tpu.memory_space<vmem>>, vector<8x128xf32>,
    return
  }
  func.func @transform_0(%arg0: i32, %arg1: i32) -> (i32, i32) {
    %c0_i32 = arith.constant 0 : i32
    %c0_i32_0 = arith.constant 0 : i32
    return %arg0, %c0_i32 : i32, i32
  }
  func.func @transform_1(%arg0: i32, %arg1: i32) -> (i32, i32) {
    %c0_i32 = arith.constant 0 : i32
    %c0_i32_0 = arith.constant 0 : i32
    %c0_i32_1 = arith.constant 0 : i32
    return %c0_i32, %c0_i32_0 : i32, i32
  }
  func.func @transform_2(%arg0: i32, %arg1: i32) -> (i32, i32) {
    %c0_i32 = arith.constant 0 : i32
    %c0_i32_0 = arith.constant 0 : i32
    return %c0_i32, %arg1 : i32, i32
  }
  func.func @transform_3(%arg0: i32, %arg1: i32) -> (i32, i32) {
    %c0_i32 = arith.constant 0 : i32
    return %arg0, %arg1 : i32, i32
  }
}

</mosaic_0001>

<llo_original>
// kernel: coda_prompt_forward.1
$region0: #{coda_prompt_forward.1}
  #allocation0 [shape = 'u32[]', space=smem, size = 0x4, offset = 0x4, fixed_abs, tag = 'smem constant byte address 0x4 - core index']
  #allocation1 [shape = 'u32[72,128]{1,0:T(1,128)}', space=vmem, size = 0x9000, scoped, tag = 'internal scratch']
  %s0 = inlined_call_operand.vmem [shape: f32[8,32], index: 0, kind: input, shape index: {}]
  %s1 = inlined_call_operand.vmem [shape: f32[16,32], index: 1, kind: input, shape index: {}]
  %s2 = inlined_call_operand.vmem [shape: f32[8,256], index: 2, kind: input, shape index: {}]
  %s3 = inlined_call_operand.vmem [shape: f32[8,256], index: 3, kind: output, shape index: {}]
  %s4 = sld [smem:[#allocation0]]
  $region45: #{coda_prompt_forward.1} parent=0
    _
  %s6 = ssub.s32 1, %s4
  %s7 = scalar_select 0, %s6, %s4
  loop: start=0, step=1, limit=4
  $region2: #{coda_prompt_forward.1} parent=0 // loop_pre_header
    _
  $region3: #{coda_prompt_forward.1} parent=0 // loop_header
    %s9 = sphi 0, %s13
    %p10 = scmp.ge.s32.totalorder %s9, 4
    %s16 = sphi 0, %s28
    %s17 = sphi 0, %s24
    %s18 = sphi 0, %s16
    %s19 = sphi 0, %s17
    %s20 = sphi 0, %s18
    %s21 = sphi 0, %s19
    %s31 = sphi 0, %s33
    %s34 = sphi 0, %s31
    %s35 = sphi 0, %s34
    %s51 = sphi 0, %s35
    %s55 = sphi 0, %s55
    %s57 = sphi 0, %s55
    %s58 = sphi 0, %s57
    %s72 = sphi 0, %s58
    %s78 = sphi 0, %s80
    %s81 = sphi 0, %s78
    %s82 = sphi 0, %s81
    %s98 = sphi 0, %s82
    %s106 = sphi 0, %s108
    %s109 = sphi 0, %s106
    %s110 = sphi 0, %s109
    %s126 = sphi 0, %s110
  $region4: #{coda_prompt_forward.1} parent=0 // loop_header_branch
    %12 = sbr.rel (%p10) target = $region8
  $region5: #{coda_prompt_forward.1} parent=0 // loop_body
    %s14 = ssub.s32 %s9, 1
    %s15 = ssub.s32 %s9, 2
    %s22 = sadd.s32 1, %s17
    %p23 = scmp.ge.s32.totalorder %s22, 2
    %s24 = scalar_select %p23, 0, %s22
    %s25 = sadd.s32 1, %s16
    %s26 = scalar_select %p23, %s25, %s16
    %p27 = scmp.ge.s32.totalorder %s26, 1
    %s28 = scalar_select %p27, 0, %s26
    %s29 = ssub.s32 %s16, %s28
    %p30 = scmp.eq.s32.totalorder %s29, 0
    %s32 = sadd.s32 %s31, 1
    %s33 = scalar_select %p30, %s31, %s32
    %p36 = pneg %p30
    %p37 = scmp.eq.s32.totalorder %s9, 1
    %p38 = por %p36, %p37
    %p39 = scmp.ne.s32.totalorder %s31, %s34
    %p40 = scmp.eq.s32.totalorder %s9, 0
    %p41 = por %p39, %p40
    %p42 = scmp.ne.s32.totalorder %s31, %s34
    %p43 = scmp.eq.s32.totalorder %s14, 1
    %p44 = por %p42, %p43
    %p45 = scmp.ne.s32.totalorder %s34, %s35
    %p46 = scmp.eq.s32.totalorder %s14, 0
    %p47 = por %p45, %p46
    %p48 = scmp.ne.s32.totalorder %s34, %s35
    %p49 = scmp.eq.s32.totalorder %s15, 1
    %p50 = por %p48, %p49
    %p52 = scmp.ne.s32.totalorder %s35, %s51
    %p53 = scmp.eq.s32.totalorder %s15, 0
    %p54 = por %p52, %p53
    %s56 = sadd.s32 %s55, 1
    %p59 = scmp.eq.s32.totalorder %s9, 1
    %p60 = scmp.ne.s32.totalorder %s55, %s57
    %p61 = scmp.eq.s32.totalorder %s9, 0
    %p62 = por %p60, %p61
    %p63 = scmp.ne.s32.totalorder %s55, %s57
    %p64 = scmp.eq.s32.totalorder %s14, 1
    %p65 = por %p63, %p64
    %p66 = scmp.ne.s32.totalorder %s57, %s58
    %p67 = scmp.eq.s32.totalorder %s14, 0
    %p68 = por %p66, %p67
    %p69 = scmp.ne.s32.totalorder %s57, %s58
    %p70 = scmp.eq.s32.totalorder %s15, 1
    %p71 = por %p69, %p70
    %p73 = scmp.ne.s32.totalorder %s58, %s72
    %p74 = scmp.eq.s32.totalorder %s15, 0
    %p75 = por %p73, %p74
    %s76 = ssub.s32 %s17, %s24
    %p77 = scmp.eq.s32.totalorder %s76, 0
    %s79 = sadd.s32 %s78, 1
    %s80 = scalar_select %p77, %s78, %s79
    %p83 = pneg %p77
    %p84 = scmp.eq.s32.totalorder %s9, 1
    %p85 = por %p83, %p84
    %p86 = scmp.ne.s32.totalorder %s78, %s81
    %p87 = scmp.eq.s32.totalorder %s9, 0
    %p88 = por %p86, %p87
    %p89 = scmp.ne.s32.totalorder %s78, %s81
    %p90 = scmp.eq.s32.totalorder %s14, 1
    %p91 = por %p89, %p90
    %p92 = scmp.ne.s32.totalorder %s81, %s82
    %p93 = scmp.eq.s32.totalorder %s14, 0
    %p94 = por %p92, %p93
    %p95 = scmp.ne.s32.totalorder %s81, %s82
    %p96 = scmp.eq.s32.totalorder %s15, 1
    %p97 = por %p95, %p96
    %p99 = scmp.ne.s32.totalorder %s82, %s98
    %p100 = scmp.eq.s32.totalorder %s15, 0
    %p101 = por %p99, %p100
    %s102 = ssub.s32 %s16, %s28
    %s103 = ssub.s32 %s17, %s24
    %s104 = sor.u32 %s102, %s103
    %p105 = scmp.eq.s32.totalorder %s104, 0
    %s107 = sadd.s32 %s106, 1
    %s108 = scalar_select %p105, %s106, %s107
    %p111 = pneg %p105
    %p112 = scmp.eq.s32.totalorder %s9, 1
    %p113 = por %p111, %p112
    %p114 = scmp.ne.s32.totalorder %s106, %s109
    %p115 = scmp.eq.s32.totalorder %s9, 0
    %p116 = por %p114, %p115
    %p117 = scmp.ne.s32.totalorder %s106, %s109
    %p118 = scmp.eq.s32.totalorder %s14, 1
    %p119 = por %p117, %p118
    %p120 = scmp.ne.s32.totalorder %s109, %s110
    %p121 = scmp.eq.s32.totalorder %s14, 0
    %p122 = por %p120, %p121
    %p123 = scmp.ne.s32.totalorder %s109, %s110
    %p124 = scmp.eq.s32.totalorder %s15, 1
    %p125 = por %p123, %p124
    %p127 = scmp.ne.s32.totalorder %s110, %s126
    %p128 = scmp.eq.s32.totalorder %s15, 0
    %p129 = por %p127, %p128
    %p130 = scmp.le.s32.totalorder 1, %s9
    %p131 = scmp.lt.s32.totalorder %s9, 3
    %p132 = pnand %p130, %p131
    %p133 = pneg %p132
    // Predicated region
    $region9: #{coda_prompt_forward.1} parent=5 // pred_check
      _
    $region10: #{coda_prompt_forward.1} parent=5 // pred_check_branch
      %135 = sbr.rel (%p132) target = $region12
    $region11: #{coda_prompt_forward.1} parent=5 // pred_region
      %s136 = ssub.s32 %s9, 1
      // Predicated region
      $region13: #{coda_prompt_forward.1} parent=11 // pred_check
        %p137 = pneg %p47
      $region14: #{coda_prompt_forward.1} parent=11 // pred_check_branch
        %139 = sbr.rel (%p137) target = $region16
      $region15: #{coda_prompt_forward.1} parent=11 // pred_region
        %p140 = scmp.lt.s32.totalorder %s18, 0
        %s141 = scalar_select %p140, %s18, 0
        %s142 = smul.addr %s141, 8
        %s143 = scalar_lea.vmem %s0, %s142
      $region16: #{coda_prompt_forward.1} parent=11 // pred_fallthru
        _
      // Predicated region
      $region17: #{coda_prompt_forward.1} parent=11 // pred_check
        %p144 = pneg %p68
      $region18: #{coda_prompt_forward.1} parent=11 // pred_check_branch
        %146 = sbr.rel (%p144) target = $region20
      $region19: #{coda_prompt_forward.1} parent=11 // pred_region
        _
      $region20: #{coda_prompt_forward.1} parent=11 // pred_fallthru
        _
    $region12: #{coda_prompt_forward.1} parent=5 // pred_fallthru
      _
    %p147 = scmp.lt.s32.totalorder %s9, 2
    // Predicated region
    $region21: #{coda_prompt_forward.1} parent=5 // pred_check
      %p148 = pneg %p147
    $region22: #{coda_prompt_forward.1} parent=5 // pred_check_branch
      %150 = sbr.rel (%p148) target = $region24
    $region23: #{coda_prompt_forward.1} parent=5 // pred_region
      // Predicated region
      $region25: #{coda_prompt_forward.1} parent=23 // pred_check
        %p151 = pneg %p88
      $region26: #{coda_prompt_forward.1} parent=23 // pred_check_branch
        %153 = sbr.rel (%p151) target = $region28
      $region27: #{coda_prompt_forward.1} parent=23 // pred_region
        %p154 = scmp.lt.s32.totalorder %s17, 1
        %s155 = scalar_select %p154, %s17, 1
        %s156 = smul.addr %s155, 8
        %s157 = scalar_lea.vmem %s2, %s156
      $region28: #{coda_prompt_forward.1} parent=23 // pred_fallthru
        _
    $region24: #{coda_prompt_forward.1} parent=5 // pred_fallthru
      _
    %p158 = scmp.le.s32.totalorder 1, %s9
    %p159 = scmp.lt.s32.totalorder %s9, 3
    %p160 = pnand %p158, %p159
    %p161 = pneg %p160
    // Predicated region
    $region29: #{coda_prompt_forward.1} parent=5 // pred_check
      _
    $region30: #{coda_prompt_forward.1} parent=5 // pred_check_branch
      %163 = sbr.rel (%p160) target = $region32
    $region31: #{coda_prompt_forward.1} parent=5 // pred_region
      %s164 = ssub.s32 %s9, 1
      %p165 = scmp.lt.s32.totalorder %s18, 0
      %s166 = scalar_select %p165, %s18, 0
      %s167 = smul.addr %s166, 8
      %s168 = scalar_lea.vmem %s0, %s167
      %p169 = pneg %p47
      %p170 = pneg %p44
      %p171 = pneg %p68
      %p172 = pneg %p65
      %p173 = scmp.lt.s32.totalorder %s19, 1
      %s174 = scalar_select %p173, %s19, 1
      %s175 = smul.addr %s174, 8
      %s176 = scalar_lea.vmem %s2, %s175
      %p177 = pneg %p94
      %p178 = pneg %p91
      %p179 = pneg %p122
      %p180 = pneg %p119
      %p181 = scmp.lt.s32.totalorder %s18, 0
      %s182 = scalar_select %p181, %s18, 0
      %p183 = scmp.lt.s32.totalorder %s19, 1
      %s184 = scalar_select %p183, %s19, 1
      %s185 = smul.addr %s182, 2
      %s186 = sadd.s32 %s184, %s185
      %s187 = smul.addr %s186, 8
      %s188 = scalar_lea.vmem %s3, %s187
      %p189 = scmp.lt.s32.totalorder %s18, 0
      %s190 = scalar_select %p189, %s18, 0
      %s191 = smul.addr %s190, 8
      %s192 = scalar_lea.vmem %s0, %s191
      %p193 = scmp.lt.s32.totalorder %s19, 1
      %s194 = scalar_select %p193, %s19, 1
      %s195 = smul.addr %s194, 8
      %s196 = scalar_lea.vmem %s2, %s195
      %p197 = scmp.lt.s32.totalorder %s18, 0
      %s198 = scalar_select %p197, %s18, 0
      %p199 = scmp.lt.s32.totalorder %s19, 1
      %s200 = scalar_select %p199, %s19, 1
      %s201 = smul.addr %s198, 2
      %s202 = sadd.s32 %s200, %s201
      %s203 = smul.addr %s202, 8
      %s204 = scalar_lea.vmem %s3, %s203
      %v205 = vld [vmem:[%s192] sm:$0xff]
      %v206 = vld [vmem:[%s1] sm:$0xff]
      %v207 = vld [vmem:[%s1 + $0x8] sm:$0xff]
      %v208 = vmul.f32 %v205, %v205
      %vm209 = vcmask 261120
      %v211 = vsel %vm209, %v205, 0
      %v214 = vsel %vm209, %v208, 0
      %v217 = vsel %vm209, %v206, 0
      %v220 = vsel %vm209, %v207, 0
      %222 = vmatpush.xpose.msra.mxu0 0.0
      %223 = vmatpush.xpose.msra.mxu0 0.0
      %224 = vmatpush.xpose.msra.mxu0 0.0
      %225 = vmatpush.xpose.msra.mxu0 0.0
      %226 = vmatpush.xpose.msra.mxu0 0.0
      %227 = vmatpush.xpose.msra.mxu0 0.0
      %228 = vmatpush.xpose.msra.mxu0 0.0
      %229 = vmatpush.xpose.msra.mxu0 0.0
      %230 = vmatpush.xpose.msra.mxu0 0.0
      %231 = vmatpush.xpose.msra.mxu0 0.0
      %232 = vmatpush.xpose.msra.mxu0 0.0
      %233 = vmatpush.xpose.msra.mxu0 0.0
      %234 = vmatpush.xpose.msra.mxu0 0.0
      %235 = vmatpush.xpose.msra.mxu0 0.0
      %236 = vmatpush.xpose.msra.mxu0 %v220
      %237 = vmatpush.xpose.msra.mxu0 %v217
      %238 = vmatmul.f32.gmra.mxu0 %v211
      %v239 = vpop.f32.mrf.mxu0
      %v240 = vadd.f32 0.0, %v239
      %241 = vmatmul.f32.gmra.mxu0 %v214
      %v242 = vpop.f32.mrf.mxu0
      %v243 = vadd.f32 0.0, %v242
      %244 = vdwg.mxu0
      %v245 = vmax.f32 %v243, 1e-24
      %v246 = vrsqrt.pop %v245
      %v247 = vmul.f32 %v246, %v245
      %v248 = vmul.f32 %v247, %v246
      %v249 = vmul.f32 0.5, %v248
      %v250 = vsub.f32 1.5, %v249
      %v251 = vmul.f32 %v246, %v250
      %vm252 = vweird.f32 %v245
      %vm253 = vweird.f32 %v246
      %vm254 = vmor %vm252, %vm253
      %v255 = vsel %vm254, %v246, %v251
      %257 = vrot.lane.b32.xlu0 %v255, 120
      %v258 = vpop.permute.xlu0 %257
      %v260 = vmul.f32 %v240, %v258
      %v261 = vld [vmem:[%s196] sm:$0xff]
      %vm262 = vcmask 64512
      %v264 = vsel %vm262, %v260, 0
      %266 = vmatpush.msra.mxu0 0.0
      %267 = vmatpush.msra.mxu0 0.0
      %268 = vmatpush.msra.mxu0 0.0
      %269 = vmatpush.msra.mxu0 0.0
      %270 = vmatpush.msra.mxu0 0.0
      %271 = vmatpush.msra.mxu0 0.0
      %272 = vmatpush.msra.mxu0 0.0
      %273 = vmatpush.msra.mxu0 0.0
      %274 = vmatpush.msra.mxu0 0.0
      %275 = vmatpush.msra.mxu0 0.0
      %276 = vmatpush.msra.mxu0 0.0
      %277 = vmatpush.msra.mxu0 0.0
      %278 = vmatpush.msra.mxu0 0.0
      %279 = vmatpush.msra.mxu0 0.0
      %280 = vmatpush.msra.mxu0 0.0
      %281 = vmatpush.msra.mxu0 %v261
      %282 = vmatmul.f32.gmra.mxu0 %v264
      %v283 = vpop.f32.mrf.mxu0
      %v284 = vadd.f32 0.0, %v283
      %285 = vdwg.mxu0
      %286 = vst [vmem:[%s204] sm:$0xff] %v284
      %p287 = scmp.lt.s32.totalorder %s18, 0
      %s288 = scalar_select %p287, %s18, 0
      %p289 = scmp.lt.s32.totalorder %s19, 1
      %s290 = scalar_select %p289, %s19, 1
      %s291 = smul.addr %s288, 2
      %s292 = sadd.s32 %s290, %s291
      %s293 = smul.addr %s292, 8
      %s294 = scalar_lea.vmem %s3, %s293
      // Predicated region
      $region33: #{coda_prompt_forward.1} parent=31 // pred_check
        %p295 = pneg %p119
      $region34: #{coda_prompt_forward.1} parent=31 // pred_check_branch
        %297 = sbr.rel (%p295) target = $region36
      $region35: #{coda_prompt_forward.1} parent=31 // pred_region
        _
      $region36: #{coda_prompt_forward.1} parent=31 // pred_fallthru
        _
    $region32: #{coda_prompt_forward.1} parent=5 // pred_fallthru
      _
    %p298 = scmp.le.s32.totalorder 2, %s9
    // Predicated region
    $region37: #{coda_prompt_forward.1} parent=5 // pred_check
      %p299 = pneg %p298
    $region38: #{coda_prompt_forward.1} parent=5 // pred_check_branch
      %301 = sbr.rel (%p299) target = $region40
    $region39: #{coda_prompt_forward.1} parent=5 // pred_region
      %s302 = ssub.s32 %s9, 2
      // Predicated region
      $region41: #{coda_prompt_forward.1} parent=39 // pred_check
        %p303 = pneg %p125
      $region42: #{coda_prompt_forward.1} parent=39 // pred_check_branch
        %305 = sbr.rel (%p303) target = $region44
      $region43: #{coda_prompt_forward.1} parent=39 // pred_region
        %p306 = scmp.lt.s32.totalorder %s20, 0
        %s307 = scalar_select %p306, %s20, 0
        %p308 = scmp.lt.s32.totalorder %s21, 1
        %s309 = scalar_select %p308, %s21, 1
        %s310 = smul.addr %s307, 2
        %s311 = sadd.s32 %s309, %s310
        %s312 = smul.addr %s311, 8
        %s313 = scalar_lea.vmem %s3, %s312
      $region44: #{coda_prompt_forward.1} parent=39 // pred_fallthru
        _
    $region40: #{coda_prompt_forward.1} parent=5 // pred_fallthru
      _
  $region6: #{coda_prompt_forward.1} parent=0 // loop_footer
    %s13 = sadd.s32 1, %s9
  $region7: #{coda_prompt_forward.1} parent=0 // loop_footer_branch
    %8 = sbr.rel target = $region3
  $region8: #{coda_prompt_forward.1} parent=0 // loop_exit
    _

</llo_original>
